<compile_context>
chip_gen: v5e
topology: v5e:2x2
jax: 0.10.0
libtpu: 0.0.40
codegen_flags: <defaults>
</compile_context>

<pallas_src>
import jax
import jax.numpy as jnp
from jax.experimental import pallas as pl
from jax.experimental.pallas import tpu as pltpu


def cal_conv_size(lin, kernel, stride):
    return (lin - kernel) // stride + 1


# ----------------------------------------------------------------------------
# TPU-generation helpers
# ----------------------------------------------------------------------------
def _device_kind():
    try:
        return jax.devices()[0].device_kind.lower()
    except Exception:
        return ""


def _is_v7x():
    kind = _device_kind()
    return ("v7" in kind) or ("7x" in kind)


def _vmem_limit_bytes():
    # v7x has 64 MiB VMEM per TensorCore -> leave headroom; v5e/v6e have 128 MiB.
    return (48 if _is_v7x() else 64) * 1024 * 1024


def _stage2_vmem_bytes(t_blk, bs_blk, nx, hidden, ny_pad):
    f32, bf16 = 4, 2
    blocks = 2 * (t_blk * bs_blk * nx            # x block (double-buffered)
                  + bs_blk * hidden              # pz block
                  + t_blk * bs_blk * ny_pad) * f32   # out block
    scratch = (t_blk * bs_blk * 5 * hidden + 2 * bs_blk * hidden) * f32  # gx + hblk + h + c
    weights = (nx * hidden + hidden * 4 * hidden) * bf16 \
        + (hidden * 4 * hidden + hidden * ny_pad + 4 * hidden + ny_pad) * f32
    return blocks + scratch + weights


# ----------------------------------------------------------------------------
# Stage 1 kernel: CNN (conv+relu, conv+relu, channel-major flatten) fused with
# the z0-rows of linearIn.  Three GEMMs + two ReLUs, H-lane-wide output.
# ----------------------------------------------------------------------------
def cnn_proj_kernel(z_ref, w1b_ref, b1r_ref, w2b_ref, b2r_ref, wz_ref, bin_ref,
                    out_ref):
    h1 = jnp.maximum(
        jnp.dot(z_ref[...], w1b_ref[...], preferred_element_type=jnp.float32)
        + b1r_ref[...], 0.0)                                    # (G, L1*C1)
    z0 = jnp.maximum(
        jnp.dot(h1, w2b_ref[...], preferred_element_type=jnp.float32)
        + b2r_ref[...], 0.0)                                    # (G, Ncnnout) channel-major
    out_ref[...] = (jnp.dot(z0, wz_ref[...], preferred_element_type=jnp.float32)
                    + bin_ref[...])                             # (G, H) = z0 @ win_z + b_in


def cnn_projection(z, prep, hidden, single_buffer):
    g, nobs = z.shape

    def wspec(shape):
        nd = len(shape)
        if single_buffer:      # constant block index -> single buffer is enough
            return pl.BlockSpec(shape, lambda i, _n=nd: (0,) * _n,
                                pipeline_mode=pl.Buffered(1))
        return pl.BlockSpec(shape, lambda i, _n=nd: (0,) * _n)

    return pl.pallas_call(
        cnn_proj_kernel,
        out_shape=jax.ShapeDtypeStruct((g, hidden), jnp.float32),
        grid_spec=pltpu.PrefetchScalarGridSpec(
            num_scalar_prefetch=0,
            grid=(1,),          # pz is computed once; one big-M GEMM, no tiling overhead
            in_specs=[pl.BlockSpec((g, nobs), lambda i: (0, 0)),
                      wspec(prep['w1b'].shape), wspec(prep['b1r'].shape),
                      wspec(prep['w2b'].shape), wspec(prep['b2r'].shape),
                      wspec(prep['win_z'].shape), wspec(prep['bin'].shape)],
            out_specs=pl.BlockSpec((g, hidden), lambda i: (0, 0)),
        ),
        compiler_params=pltpu.CompilerParams(
            dimension_semantics=("arbitrary",),
            vmem_limit_bytes=_vmem_limit_bytes()),
    )(z, prep['w1b'], prep['b1r'], prep['w2b'], prep['b2r'],
      prep['win_z'], prep['bin'])


# ----------------------------------------------------------------------------
# Stage 2 kernel: linearIn + ReLU + single-layer LSTM (cudnn gate order i,f,g,o)
# + fused linearOut into a 128-lane-padded output.
# ----------------------------------------------------------------------------
def lstm_kernel(x_ref, pz_ref, winx_ref, wih_ref, whh_ref, bg_ref,
                wout_ref, bout_ref, out_ref, h_sc, c_sc, gx_sc, hblk_sc):
    tb = pl.program_id(1)                 # time-block index (innermost grid axis)

    @pl.when(tb == 0)                     # new batch block -> reset carried state
    def _():
        h_sc[...] = jnp.zeros_like(h_sc)
        c_sc[...] = jnp.zeros_like(c_sc)

    t_blk, bsb, nx = x_ref.shape
    hdim = h_sc.shape[1]

    # Hoisted, time-invariant projections for the whole time block
    # (bf16 operands, f32 accumulation):
    #   a  = relu(x @ win_x + (z0 @ win_z + b_in))
    #   gx = a @ w_ih + (b_ih + b_hh)
    x2 = x_ref[...].reshape(t_blk * bsb, nx).astype(jnp.bfloat16)
    a = jnp.dot(x2, winx_ref[...], preferred_element_type=jnp.float32)
    a = jnp.maximum(a.reshape(t_blk, bsb, hdim) + pz_ref[...][None], 0.0)
    gx = jnp.dot(a.reshape(t_blk * bsb, hdim).astype(jnp.bfloat16), wih_ref[...],
                 preferred_element_type=jnp.float32) + bg_ref[...]
    gx_sc[...] = gx.reshape(t_blk, bsb, 4 * hdim)   # stage in VMEM -> flat vreg pressure

    # Recurrence: (bs, H) @ (H, 4H) matmul + cell math per timestep.
    # Kept f32: the per-step critical path is EUP/VPU (sigmoid/tanh/cell math),
    # not the MXU, so bf16 here would only add converts.
    whh = whh_ref[...]
    h = h_sc[...]
    c = c_sc[...]
    for t in range(t_blk):                # static unroll over the time block
        g = gx_sc[t] + jnp.dot(h, whh, preferred_element_type=jnp.float32)
        i = jax.nn.sigmoid(g[:, 0 * hdim:1 * hdim])   # cudnn gate order i,f,g,o
        f = jax.nn.sigmoid(g[:, 1 * hdim:2 * hdim])
        u = jnp.tanh(g[:, 2 * hdim:3 * hdim])
        o = jax.nn.sigmoid(g[:, 3 * hdim:4 * hdim])
        c = f * c + i * u
        h = o * jnp.tanh(c)
        hblk_sc[t] = h                    # lane-dense (bs, H) stage in VMEM
    h_sc[...] = h
    c_sc[...] = c

    # Fused linearOut: one lane-dense (t_blk*bs, H) @ (H, ny_pad) GEMM per block,
    # so the full hidden-state tensor never goes to HBM.
    hb = hblk_sc[...].reshape(t_blk * bsb, hdim)
    out = jnp.dot(hb, wout_ref[...], preferred_element_type=jnp.float32) + bout_ref[...]
    out_ref[...] = out.reshape(t_blk, bsb, -1)


def lstm_head(x, pz, prep, hidden, ny_pad, t_blk, bs_blk, single_buffer, vmem_limit):
    rho, bs, nx = x.shape
    assert rho % t_blk == 0 and bs % bs_blk == 0
    grid = (bs // bs_blk, rho // t_blk)   # batch outer, time innermost (carried)

    def wspec(shape):
        nd = len(shape)
        if single_buffer:
            return pl.BlockSpec(shape, lambda b, t, _n=nd: (0,) * _n,
                                pipeline_mode=pl.Buffered(1))
        return pl.BlockSpec(shape, lambda b, t, _n=nd: (0,) * _n)

    return pl.pallas_call(
        lstm_kernel,
        out_shape=jax.ShapeDtypeStruct((rho, bs, ny_pad), jnp.float32),
        grid_spec=pltpu.PrefetchScalarGridSpec(
            num_scalar_prefetch=0,
            grid=grid,
            in_specs=[
                pl.BlockSpec((t_blk, bs_blk, nx), lambda b, t: (t, b, 0)),
                pl.BlockSpec((bs_blk, hidden), lambda b, t: (b, 0)),
                wspec(prep['win_x'].shape),
                wspec(prep['wih'].shape),
                wspec(prep['whh'].shape),
                wspec(prep['b_gates'].shape),
                wspec(prep['wout_pad'].shape),
                wspec(prep['bout_pad'].shape),
            ],
            out_specs=pl.BlockSpec((t_blk, bs_blk, ny_pad), lambda b, t: (t, b, 0)),
            scratch_shapes=[pltpu.VMEM((bs_blk, hidden), jnp.float32),       # h carry
                            pltpu.VMEM((bs_blk, hidden), jnp.float32),       # c carry
                            pltpu.VMEM((t_blk, bs_blk, 4 * hidden), jnp.float32),  # gx
                            pltpu.VMEM((t_blk, bs_blk, hidden), jnp.float32)],     # h block
        ),
        compiler_params=pltpu.CompilerParams(
            dimension_semantics=("parallel", "arbitrary"),
            vmem_limit_bytes=vmem_limit),
    )(x, pz, prep['win_x'], prep['wih'], prep['whh'], prep['b_gates'],
      prep['wout_pad'], prep['bout_pad'])


# ----------------------------------------------------------------------------
# Host-side weight packing (done once): banded conv matrices, split/fused
# biases, bf16 casts for the hoisted GEMM weights, 128-lane-padded linearOut.
# ----------------------------------------------------------------------------
def prepare(params, cfg):
    s1, s2 = cfg['stride']
    L1, L2 = cfg['louts']
    nx, nobs = cfg['nx'], cfg['nobs']
    hidden, ny = cfg['hidden'], cfg['ny']
    w1, w2 = params['w1'], params['w2']        # (K1,1,C1), (K2,C1,C2)
    K1, _, C1 = w1.shape
    K2, _, C2 = w2.shape

    # conv1 as a GEMM: h1[:, l*C1 + c] = sum_k z[:, l*s1 + k] * w1[k, 0, c]
    w1b = jnp.zeros((nobs, L1 * C1), jnp.float32)
    for l in range(L1):
        w1b = w1b.at[l * s1:l * s1 + K1, l * C1:(l + 1) * C1].set(w1[:, 0, :])
    b1r = jnp.tile(params['b1'], L1)[None, :]                   # (1, L1*C1)

    # conv2 as a GEMM with channel-major output columns (torch .view order):
    # z0[:, c*L2 + l] = sum_{k,cin} h1[:, (l*s2+k)*C1 + cin] * w2[k, cin, c]
    w2b = jnp.zeros((L1 * C1, L2 * C2), jnp.float32)
    for l in range(L2):
        for k in range(K2):
            r0 = (l * s2 + k) * C1
            for c in range(C2):
                w2b = w2b.at[r0:r0 + C1, c * L2 + l].set(w2[k, :, c])
    b2r = jnp.repeat(params['b2'], L2)[None, :]                 # (1, Ncnnout)

    # linearOut padded to 128 lanes (lane-dense in-kernel stores); sliced later.
    ny_pad = -(-ny // 128) * 128
    wout_pad = jnp.zeros((hidden, ny_pad), jnp.float32).at[:, :ny].set(params['wout'])
    bout_pad = jnp.zeros((1, ny_pad), jnp.float32).at[:, :ny].set(params['bout'][None, :])

    return dict(
        w1b=w1b, b1r=b1r, w2b=w2b, b2r=b2r,
        # hoisted GEMM weights in bf16 (f32 accumulation at the dot sites)
        win_x=params['win'][:nx].astype(jnp.bfloat16),          # (nx, H)
        win_z=params['win'][nx:],                               # (Ncnnout, H) f32
        bin=params['bin'][None, :],                             # (1, H)
        wih=params['wih'].astype(jnp.bfloat16),                 # (H, 4H) bf16
        whh=params['whh'],                                      # (H, 4H) f32 (recurrence)
        b_gates=(params['bih'] + params['bhh'])[None, :],       # (1, 4H) fused bias
        wout_pad=wout_pad, bout_pad=bout_pad,
    )


# ----------------------------------------------------------------------------
# Full forward
# ----------------------------------------------------------------------------
def forward(prep, x, z, cfg, t_blk=16, bs_blk=None):
    rho, bs, nx = x.shape
    assert z.shape[0] == bs, "CNN1dLCmodel requires ngrid == batch size"
    hidden, ny = cfg['hidden'], cfg['ny']
    ny_pad = prep['wout_pad'].shape[1]

    # Batch blocking: single block on single-TC chips (v5e/v6e); split in two
    # only on v7x (2 TCs) and only if each half keeps a reasonable M.
    if bs_blk is None:
        bs_blk = bs
        if _is_v7x() and bs >= 128 and (bs // 2) % 8 == 0:
            bs_blk = bs // 2

    # Generation-aware VMEM budget; shrink the time block if the working set
    # (double-buffered blocks + gx/h scratch + weights) would not fit.
    vmem_limit = _vmem_limit_bytes()
    while t_blk > 8 and _stage2_vmem_bytes(t_blk, bs_blk, nx, hidden, ny_pad) \
            > 0.75 * vmem_limit:
        t_blk //= 2

    # Pad rho (e.g. 365) up to a multiple of the time block; padded steps run
    # after the real ones within each batch block and are sliced off.
    rho_pad = -(-rho // t_blk) * t_blk
    if rho_pad != rho:
        x = jnp.concatenate(
            [x, jnp.zeros((rho_pad - rho, bs, nx), x.dtype)], axis=0)

    def with_buffer_fallback(fn):
        try:
            return fn(True)     # resident weights single-buffered (pl.Buffered(1))
        except (TypeError, ValueError, NotImplementedError, pltpu.LoweringException):
            return fn(False)    # pipeline_mode unsupported -> default double-buffering

    pz = with_buffer_fallback(
        lambda sb: cnn_projection(z, prep, hidden, sb))                 # (ngrid, H)
    out = with_buffer_fallback(
        lambda sb: lstm_head(x, pz, prep, hidden, ny_pad,
                             t_blk, bs_blk, sb, vmem_limit))            # (rho_pad, bs, ny_pad)
    return out[:rho, :, :ny]


# ----------------------------------------------------------------------------
# Pure-JAX reference (same math, f32 everywhere) for correctness checking
# ----------------------------------------------------------------------------
def _conv_relu_ref(x, w, b, stride, lout):
    K = w.shape[0]
    cols = [jnp.einsum('gkc,kco->go', x[:, l * stride:l * stride + K, :], w)
            for l in range(lout)]
    return jnp.maximum(jnp.stack(cols, axis=1) + b, 0.0)


def reference_forward(params, x, z, cfg):
    s1, s2 = cfg['stride']
    l1, l2 = cfg['louts']
    h1 = _conv_relu_ref(z[:, :, None], params['w1'], params['b1'], s1, l1)
    h2 = _conv_relu_ref(h1, params['w2'], params['b2'], s2, l2)
    z0 = jnp.transpose(h2, (0, 2, 1)).reshape(z.shape[0], -1)   # channel-major flatten
    rho = x.shape[0]
    xcat = jnp.concatenate(
        [x, jnp.broadcast_to(z0[None], (rho,) + z0.shape)], axis=2)
    a = jnp.maximum(jnp.einsum('tbf,fh->tbh', xcat, params['win']) + params['bin'], 0.0)
    H = cfg['hidden']

    def step(carry, at):
        h, c = carry
        gates = at @ params['wih'] + params['bih'] + h @ params['whh'] + params['bhh']
        i = jax.nn.sigmoid(gates[:, 0 * H:1 * H])
        f = jax.nn.sigmoid(gates[:, 1 * H:2 * H])
        g = jnp.tanh(gates[:, 2 * H:3 * H])
        o = jax.nn.sigmoid(gates[:, 3 * H:4 * H])
        c = f * c + i * g
        h = o * jnp.tanh(c)
        return (h, c), h

    h0 = jnp.zeros((x.shape[1], H), jnp.float32)
    _, hs = jax.lax.scan(step, (h0, h0), a)
    return jnp.einsum('tbh,hy->tby', hs, params['wout']) + params['bout']


def init_params(key, nx, ny, nobs, hidden, nkernel=(10, 5), kernel_size=(3, 3),
                stride=(2, 1)):
    def unif(k, shape, bound):
        return jax.random.uniform(k, shape, jnp.float32, -bound, bound)

    ks = jax.random.split(key, 12)
    c1, c2 = nkernel
    k1, k2 = kernel_size
    s1, s2 = stride
    l1 = cal_conv_size(nobs, k1, s1)
    l2 = cal_conv_size(l1, k2, s2)
    ncnnout = l2 * c2
    nf = ncnnout + nx
    b_c1 = 1.0 / (1 * k1) ** 0.5
    b_c2 = 1.0 / (c1 * k2) ** 0.5
    b_in = 1.0 / nf ** 0.5
    b_h = 1.0 / hidden ** 0.5
    params = dict(
        # conv weights stored as (K, Cin, Cout); biases as vectors
        w1=unif(ks[0], (k1, 1, c1), b_c1), b1=unif(ks[1], (c1,), b_c1),
        w2=unif(ks[2], (k2, c1, c2), b_c2), b2=unif(ks[3], (c2,), b_c2),
        # linearIn stored transposed: (Nf, H), rows = [x vars | cnn feats (ch-major)]
        win=unif(ks[4], (nf, hidden), b_in), bin=unif(ks[5], (hidden,), b_in),
        # LSTM weights stored transposed: (in, 4H), cudnn gate order i,f,g,o
        wih=unif(ks[6], (hidden, 4 * hidden), b_h), bih=unif(ks[7], (4 * hidden,), b_h),
        whh=unif(ks[8], (hidden, 4 * hidden), b_h), bhh=unif(ks[9], (4 * hidden,), b_h),
        # linearOut stored transposed: (H, ny)
        wout=unif(ks[10], (hidden, ny), b_h), bout=unif(ks[11], (ny,), b_h),
    )
    cfg = dict(stride=stride, louts=(l1, l2), ncnnout=ncnnout,
               hidden=hidden, nobs=nobs, nx=nx, ny=ny)
    return params, cfg


if __name__ == "__main__":
    # Small shapes, aligned to TPU tiles: bs multiple of 8, hidden multiple of 128.
    nx, ny, nobs, hidden = 4, 2, 16, 128
    rho, bs = 16, 16          # ngrid == batch size (required by the torch model)
    nkernel, kernel_size, stride = (10, 5), (3, 3), (2, 1)

    root = jax.random.PRNGKey(0)
    kp, kx, kz = jax.random.split(root, 3)
    params, cfg = init_params(kp, nx, ny, nobs, hidden, nkernel, kernel_size, stride)
    prep = prepare(params, cfg)

    x = jax.random.normal(kx, (rho, bs, nx), jnp.float32)   # (rho, BS, Nvar)
    z = jax.random.normal(kz, (bs, nobs), jnp.float32)      # (ngrid, nobs)

    out = forward(prep, x, z, cfg)
    out = jax.block_until_ready(out)
    assert out.shape == (rho, bs, ny)

    # bf16 GEMM operands (f32 accumulation) -> loosened parity tolerance.
    ref = reference_forward(params, x, z, cfg)
    assert jnp.allclose(out, ref, rtol=2e-2, atol=2e-2), "mismatch vs JAX reference"

    print("KERNEL_OK")
</pallas_src>

<mosaic_0001>
module attributes {stable_mosaic.version = 11 : i64} {
  func.func @cnn_proj_kernel(%arg0: i32, %arg1: memref<16x16xf32, #tpu.memory_space<vmem>>, %arg2: memref<16x70xf32, #tpu.memory_space<vmem>>, %arg3: memref<1x70xf32, #tpu.memory_space<vmem>>, %arg4: memref<70x25xf32, #tpu.memory_space<vmem>>, %arg5: memref<1x25xf32, #tpu.memory_space<vmem>>, %arg6: memref<25x128xf32, #tpu.memory_space<vmem>>, %arg7: memref<1x128xf32, #tpu.memory_space<vmem>>, %arg8: memref<16x128xf32, #tpu.memory_space<vmem>>) attributes {dimension_semantics = [#tpu.dimension_semantics<arbitrary>], iteration_bounds = array<i64: 1>, scalar_prefetch = 0 : i64, scratch_operands = 0 : i64, tpu.core_type = #tpu.core_type<tc>, window_params = [{pipeline_mode = #tpu.pipeline_mode<synchronous>, transform_indices = @transform_0, window_bounds = array<i64: 16, 16>}, {pipeline_mode = #tpu.pipeline_mode<synchronous>, transform_indices = @transform_1, window_bounds = array<i64: 16, 70>}, {pipeline_mode = #tpu.pipeline_mode<synchronous>, transform_indices = @transform_2, window_bounds = array<i64: 1, 70>}, {pipeline_mode = #tpu.pipeline_mode<synchronous>, transform_indices = @transform_3, window_bounds = array<i64: 70, 25>}, {pipeline_mode = #tpu.pipeline_mode<synchronous>, transform_indices = @transform_4, window_bounds = array<i64: 1, 25>}, {pipeline_mode = #tpu.pipeline_mode<synchronous>, transform_indices = @transform_5, window_bounds = array<i64: 25, 128>}, {pipeline_mode = #tpu.pipeline_mode<synchronous>, transform_indices = @transform_6, window_bounds = array<i64: 1, 128>}, {pipeline_mode = #tpu.pipeline_mode<synchronous>, transform_indices = @transform_7, window_bounds = array<i64: 16, 128>}]} {
    %c0 = arith.constant 0 : index
    %c0_0 = arith.constant 0 : index
    %0 = vector.load %arg1[%c0, %c0_0] : memref<16x16xf32, #tpu.memory_space<vmem>>, vector<16x16xf32>
    %c0_1 = arith.constant 0 : index
    %c0_2 = arith.constant 0 : index
    %1 = vector.load %arg2[%c0_1, %c0_2] : memref<16x70xf32, #tpu.memory_space<vmem>>, vector<16x70xf32>
    %cst = arith.constant dense<0.000000e+00> : vector<16x70xf32>
    %2 = tpu.matmul %0, %1, %cst {dimension_numbers = #tpu.dot_dimension_numbers<[1], [0], [0], [1], [0, 0, 1, 1], [], []>} : vector<16x16xf32>, vector<16x70xf32>, vector<16x70xf32> -> vector<16x70xf32>
    %c0_3 = arith.constant 0 : index
    %c0_4 = arith.constant 0 : index
    %3 = vector.load %arg3[%c0_3, %c0_4] : memref<1x70xf32, #tpu.memory_space<vmem>>, vector<1x70xf32>
    %4 = vector.broadcast %3 : vector<1x70xf32> to vector<16x70xf32>
    %5 = arith.addf %2, %4 : vector<16x70xf32>
    %cst_5 = arith.constant 0.000000e+00 : f32
    %6 = vector.broadcast %cst_5 : f32 to vector<16x70xf32>
    %7 = arith.maximumf %5, %6 : vector<16x70xf32>
    %c0_6 = arith.constant 0 : index
    %c0_7 = arith.constant 0 : index
    %8 = vector.load %arg4[%c0_6, %c0_7] : memref<70x25xf32, #tpu.memory_space<vmem>>, vector<70x25xf32>
    %cst_8 = arith.constant dense<0.000000e+00> : vector<16x25xf32>
    %9 = tpu.matmul %7, %8, %cst_8 {dimension_numbers = #tpu.dot_dimension_numbers<[1], [0], [0], [1], [0, 0, 1, 1], [], []>} : vector<16x70xf32>, vector<70x25xf32>, vector<16x25xf32> -> vector<16x25xf32>
    %c0_9 = arith.constant 0 : index
    %c0_10 = arith.constant 0 : index
    %10 = vector.load %arg5[%c0_9, %c0_10] : memref<1x25xf32, #tpu.memory_space<vmem>>, vector<1x25xf32>
    %11 = vector.broadcast %10 : vector<1x25xf32> to vector<16x25xf32>
    %12 = arith.addf %9, %11 : vector<16x25xf32>
    %cst_11 = arith.constant 0.000000e+00 : f32
    %13 = vector.broadcast %cst_11 : f32 to vector<16x25xf32>
    %14 = arith.maximumf %12, %13 : vector<16x25xf32>
    %c0_12 = arith.constant 0 : index
    %c0_13 = arith.constant 0 : index
    %15 = vector.load %arg6[%c0_12, %c0_13] : memref<25x128xf32, #tpu.memory_space<vmem>>, vector<25x128xf32>
    %cst_14 = arith.constant dense<0.000000e+00> : vector<16x128xf32>
    %16 = tpu.matmul %14, %15, %cst_14 {dimension_numbers = #tpu.dot_dimension_numbers<[1], [0], [0], [1], [0, 0, 1, 1], [], []>} : vector<16x25xf32>, vector<25x128xf32>, vector<16x128xf32> -> vector<16x128xf32>
    %c0_15 = arith.constant 0 : index
    %c0_16 = arith.constant 0 : index
    %17 = vector.load %arg7[%c0_15, %c0_16] : memref<1x128xf32, #tpu.memory_space<vmem>>, vector<1x128xf32>
    %18 = vector.broadcast %17 : vector<1x128xf32> to vector<16x128xf32>
    %19 = arith.addf %16, %18 : vector<16x128xf32>
    %c0_17 = arith.constant 0 : index
    %c0_18 = arith.constant 0 : index
    %20 = vector.load %arg8[%c0_17, %c0_18] : memref<16x128xf32, #tpu.memory_space<vmem>>, vector<16x128xf32>
    tpu.vector_store %arg8[%c0_17, %c0_18], %19 {strides = array<i32>} : memref<16x128xf32, #tpu.memory_space<vmem>>, vector<16x128xf32>,
    return
  }
  func.func @transform_0(%arg0: i32) -> (i32, i32) {
    %c0_i32 = arith.constant 0 : i32
    %c0_i32_0 = arith.constant 0 : i32
    %c0_i32_1 = arith.constant 0 : i32
    return %c0_i32, %c0_i32_0 : i32, i32
  }
  func.func @transform_1(%arg0: i32) -> (i32, i32) {
    %c0_i32 = arith.constant 0 : i32
    %c0_i32_0 = arith.constant 0 : i32
    %c0_i32_1 = arith.constant 0 : i32
    return %c0_i32, %c0_i32_0 : i32, i32
  }
  func.func @transform_2(%arg0: i32) -> (i32, i32) {
    %c0_i32 = arith.constant 0 : i32
    %c0_i32_0 = arith.constant 0 : i32
    %c0_i32_1 = arith.constant 0 : i32
    return %c0_i32, %c0_i32_0 : i32, i32
  }
  func.func @transform_3(%arg0: i32) -> (i32, i32) {
    %c0_i32 = arith.constant 0 : i32
    %c0_i32_0 = arith.constant 0 : i32
    %c0_i32_1 = arith.constant 0 : i32
    return %c0_i32, %c0_i32_0 : i32, i32
  }
  func.func @transform_4(%arg0: i32) -> (i32, i32) {
    %c0_i32 = arith.constant 0 : i32
    %c0_i32_0 = arith.constant 0 : i32
    %c0_i32_1 = arith.constant 0 : i32
    return %c0_i32, %c0_i32_0 : i32, i32
  }
  func.func @transform_5(%arg0: i32) -> (i32, i32) {
    %c0_i32 = arith.constant 0 : i32
    %c0_i32_0 = arith.constant 0 : i32
    %c0_i32_1 = arith.constant 0 : i32
    return %c0_i32, %c0_i32_0 : i32, i32
  }
  func.func @transform_6(%arg0: i32) -> (i32, i32) {
    %c0_i32 = arith.constant 0 : i32
    %c0_i32_0 = arith.constant 0 : i32
    %c0_i32_1 = arith.constant 0 : i32
    return %c0_i32, %c0_i32_0 : i32, i32
  }
  func.func @transform_7(%arg0: i32) -> (i32, i32) {
    %c0_i32 = arith.constant 0 : i32
    %c0_i32_0 = arith.constant 0 : i32
    %c0_i32_1 = arith.constant 0 : i32
    return %c0_i32, %c0_i32_0 : i32, i32
  }
}

</mosaic_0001>

<llo_original>
// kernel: tpu_custom_call.1
$region0: #{tpu_custom_call.1}
  #allocation0 [shape = 'u32[]', space=smem, size = 0x4, offset = 0x4, fixed_abs, tag = 'smem constant byte address 0x4 - core index']
  #allocation1 [shape = 'u32[72,128]{1,0:T(1,128)}', space=vmem, size = 0x9000, scoped, tag = 'internal scratch']
  %s0 = inlined_call_operand.vmem [shape: f32[16,16], index: 0, kind: input, shape index: {}]
  %s1 = inlined_call_operand.vmem [shape: f32[16,70], index: 1, kind: input, shape index: {}]
  %s2 = inlined_call_operand.vmem [shape: f32[1,70], index: 2, kind: input, shape index: {}]
  %s3 = inlined_call_operand.vmem [shape: f32[70,25], index: 3, kind: input, shape index: {}]
  %s4 = inlined_call_operand.vmem [shape: f32[1,25], index: 4, kind: input, shape index: {}]
  %s5 = inlined_call_operand.vmem [shape: f32[25,128], index: 5, kind: input, shape index: {}]
  %s6 = inlined_call_operand.vmem [shape: f32[1,128], index: 6, kind: input, shape index: {}]
  %s7 = inlined_call_operand.hbm [shape: f32[16,128], index: 7, kind: output, shape index: {}]
  %s8 = sld [smem:[#allocation0]]
  $region38: #{tpu_custom_call.1} parent=0
    _
  %s10 = ssub.s32 1, %s8
  %s11 = scalar_select 0, %s10, %s8
  $region1: #{tpu_custom_call.1} parent=0
    #allocation2 [shape = 'u8[8192]{0}', space=vmem, size = 0x2000, scoped, tag = 'output window, operand 0, single buffered']
    #allocation3 [shape = 's32[1]{0}', space=sflag, size = 0x4, scoped, tag = 'scoped memory for tpu_custom_call.1']
    %12 = vsyncpa [#allocation3], 0
    // Predicated region
    $region2: #{tpu_custom_call.1} parent=1 // pred_check
      _
    $region3: #{tpu_custom_call.1} parent=1 // pred_check_branch
      %14 = sbr.rel (0) target = $region5
    $region4: #{tpu_custom_call.1} parent=1 // pred_region
      _
    $region5: #{tpu_custom_call.1} parent=1 // pred_fallthru
      _
    // Predicated region
    $region6: #{tpu_custom_call.1} parent=1 // pred_check
      _
    $region7: #{tpu_custom_call.1} parent=1 // pred_check_branch
      %16 = sbr.rel (0) target = $region9
    $region8: #{tpu_custom_call.1} parent=1 // pred_region
      _
    $region9: #{tpu_custom_call.1} parent=1 // pred_fallthru
      _
    // Predicated region
    $region10: #{tpu_custom_call.1} parent=1 // pred_check
      _
    $region11: #{tpu_custom_call.1} parent=1 // pred_check_branch
      %18 = sbr.rel (0) target = $region13
    $region12: #{tpu_custom_call.1} parent=1 // pred_region
      _
    $region13: #{tpu_custom_call.1} parent=1 // pred_fallthru
      _
    // Predicated region
    $region14: #{tpu_custom_call.1} parent=1 // pred_check
      _
    $region15: #{tpu_custom_call.1} parent=1 // pred_check_branch
      %20 = sbr.rel (0) target = $region17
    $region16: #{tpu_custom_call.1} parent=1 // pred_region
      _
    $region17: #{tpu_custom_call.1} parent=1 // pred_fallthru
      _
    // Predicated region
    $region18: #{tpu_custom_call.1} parent=1 // pred_check
      _
    $region19: #{tpu_custom_call.1} parent=1 // pred_check_branch
      %22 = sbr.rel (0) target = $region21
    $region20: #{tpu_custom_call.1} parent=1 // pred_region
      _
    $region21: #{tpu_custom_call.1} parent=1 // pred_fallthru
      _
    // Predicated region
    $region22: #{tpu_custom_call.1} parent=1 // pred_check
      _
    $region23: #{tpu_custom_call.1} parent=1 // pred_check_branch
      %24 = sbr.rel (0) target = $region25
    $region24: #{tpu_custom_call.1} parent=1 // pred_region
      _
    $region25: #{tpu_custom_call.1} parent=1 // pred_fallthru
      _
    // Predicated region
    $region26: #{tpu_custom_call.1} parent=1 // pred_check
      _
    $region27: #{tpu_custom_call.1} parent=1 // pred_check_branch
      %26 = sbr.rel (0) target = $region29
    $region28: #{tpu_custom_call.1} parent=1 // pred_region
      _
    $region29: #{tpu_custom_call.1} parent=1 // pred_fallthru
      _
    %v27 = vld [vmem:[%s0] sm:$0xff]
    %v28 = vld [vmem:[%s0 + $0x8] sm:$0xff]
    %v29 = vld [vmem:[%s1] sm:$0xff]
    %v30 = vld [vmem:[%s1 + $0x8] sm:$0xff]
    %v31 = vld [vmem:[%s2] sm:$0x1]
    %v33 = vperm.slane %v31, 0
    %vm35 = vcmask 130048
    %v37 = vsel %vm35, %v27, 0
    %v40 = vsel %vm35, %v28, 0
    %42 = vmatpush.msra.mxu0 0.0
    %43 = vmatpush.msra.mxu0 0.0
    %44 = vmatpush.msra.mxu0 0.0
    %45 = vmatpush.msra.mxu0 0.0
    %46 = vmatpush.msra.mxu0 0.0
    %47 = vmatpush.msra.mxu0 0.0
    %48 = vmatpush.msra.mxu0 0.0
    %49 = vmatpush.msra.mxu0 0.0
    %50 = vmatpush.msra.mxu0 0.0
    %51 = vmatpush.msra.mxu0 0.0
    %52 = vmatpush.msra.mxu0 0.0
    %53 = vmatpush.msra.mxu0 0.0
    %54 = vmatpush.msra.mxu0 0.0
    %55 = vmatpush.msra.mxu0 0.0
    %56 = vmatpush.msra.mxu0 %v30
    %57 = vmatpush.msra.mxu0 %v29
    %58 = vmatmul.f32.gmra.mxu0 %v37
    %v59 = vpop.f32.mrf.mxu0
    %v60 = vadd.f32 %v33, %v59
    %61 = vmatmul.f32.gmra.mxu0 %v40
    %v62 = vpop.f32.mrf.mxu0
    %v63 = vadd.f32 %v33, %v62
    %64 = vdwg.mxu0
    %v65 = vmax.f32 %v60, 0.0
    %v66 = vmax.f32 %v63, 0.0
    %v67 = vld [vmem:[%s3] sm:$0xff]
    %v68 = vld [vmem:[%s3 + $0x8] sm:$0xff]
    %v69 = vld [vmem:[%s3 + $0x10] sm:$0xff]
    %v70 = vld [vmem:[%s3 + $0x18] sm:$0xff]
    %v71 = vld [vmem:[%s3 + $0x20] sm:$0xff]
    %v72 = vld [vmem:[%s3 + $0x28] sm:$0xff]
    %v73 = vld [vmem:[%s3 + $0x30] sm:$0xff]
    %v74 = vld [vmem:[%s3 + $0x38] sm:$0xff]
    %v75 = vld [vmem:[%s3 + $0x40] sm:$0x3f]
    %v76 = vld [vmem:[%s4] sm:$0x1]
    %v78 = vperm.slane %v76, 0
    %vm80 = vcmask 572416
    %v82 = vsel %vm80, %v65, 0
    %v85 = vsel %vm80, %v66, 0
    %vm87 = vcmask 1045504
    %v89 = vsel %vm87, %v75, 0
    %91 = vmatpush.msra.mxu0 0.0
    %92 = vmatpush.msra.mxu0 0.0
    %93 = vmatpush.msra.mxu0 0.0
    %94 = vmatpush.msra.mxu0 0.0
    %95 = vmatpush.msra.mxu0 0.0
    %96 = vmatpush.msra.mxu0 0.0
    %97 = vmatpush.msra.mxu0 0.0
    %98 = vmatpush.msra.mxu0 %v89
    %99 = vmatpush.msra.mxu0 %v74
    %100 = vmatpush.msra.mxu0 %v73
    %101 = vmatpush.msra.mxu0 %v72
    %102 = vmatpush.msra.mxu0 %v71
    %103 = vmatpush.msra.mxu0 %v70
    %104 = vmatpush.msra.mxu0 %v69
    %105 = vmatpush.msra.mxu0 %v68
    %106 = vmatpush.msra.mxu0 %v67
    %107 = vmatmul.f32.gmra.mxu0 %v82
    %v108 = vpop.f32.mrf.mxu0
    %v109 = vadd.f32 %v78, %v108
    %110 = vmatmul.f32.gmra.mxu0 %v85
    %v111 = vpop.f32.mrf.mxu0
    %v112 = vadd.f32 %v78, %v111
    %113 = vdwg.mxu0
    %v114 = vmax.f32 %v109, 0.0
    %v115 = vmax.f32 %v112, 0.0
    %v116 = vld [vmem:[%s5] sm:$0xff]
    %v117 = vld [vmem:[%s5 + $0x8] sm:$0xff]
    %v118 = vld [vmem:[%s5 + $0x10] sm:$0xff]
    %v119 = vld [vmem:[%s5 + $0x18] sm:$0x1]
    %v120 = vld [vmem:[%s6] sm:$0x1]
    %v122 = vperm.slane %v120, 0
    %vm124 = vcmask 203776
    %v126 = vsel %vm124, %v114, 0
    %v129 = vsel %vm124, %v115, 0
    %vm131 = vcmask 1040384
    %v133 = vsel %vm131, %v119, 0
    %135 = vmatpush.msra.mxu0 0.0
    %136 = vmatpush.msra.mxu0 0.0
    %137 = vmatpush.msra.mxu0 0.0
    %138 = vmatpush.msra.mxu0 0.0
    %139 = vmatpush.msra.mxu0 0.0
    %140 = vmatpush.msra.mxu0 0.0
    %141 = vmatpush.msra.mxu0 0.0
    %142 = vmatpush.msra.mxu0 0.0
    %143 = vmatpush.msra.mxu0 0.0
    %144 = vmatpush.msra.mxu0 0.0
    %145 = vmatpush.msra.mxu0 0.0
    %146 = vmatpush.msra.mxu0 0.0
    %147 = vmatpush.msra.mxu0 %v133
    %148 = vmatpush.msra.mxu0 %v118
    %149 = vmatpush.msra.mxu0 %v117
    %150 = vmatpush.msra.mxu0 %v116
    %151 = vmatmul.f32.gmra.mxu0 %v126
    %v152 = vpop.f32.mrf.mxu0
    %v153 = vadd.f32 %v122, %v152
    %154 = vmatmul.f32.gmra.mxu0 %v129
    %v155 = vpop.f32.mrf.mxu0
    %v156 = vadd.f32 %v122, %v155
    %157 = vdwg.mxu0
    %158 = vst [vmem:[#allocation2] sm:$0xff] %v153
    %159 = vst [vmem:[#allocation2 + $0x8] sm:$0xff] %v156
    // Predicated region
    $region30: #{tpu_custom_call.1} parent=1 // pred_check
      _
    $region31: #{tpu_custom_call.1} parent=1 // pred_check_branch
      %161 = sbr.rel (0) target = $region33
    $region32: #{tpu_custom_call.1} parent=1 // pred_region
      %163 = vsyncadd [#allocation3], 0
      %s164 = sshll.u32 [#allocation2], 4
      %s165 = int_to_ptr.vmem [resolvable:$true] %s164
      %s166 = sshll.u32 %s7, 4
      %s167 = int_to_ptr.hbm [resolvable:$true] %s166
      %172 = dma.vmem_to_hbm [thread:$0]  %s165, 256, %s167, [#allocation3], 128, 128, 8
    $region33: #{tpu_custom_call.1} parent=1 // pred_fallthru
      _
    // Predicated region
    $region34: #{tpu_custom_call.1} parent=1 // pred_check
      _
    $region35: #{tpu_custom_call.1} parent=1 // pred_check_branch
      %174 = sbr.rel (0) target = $region37
    $region36: #{tpu_custom_call.1} parent=1 // pred_region
      %176 = dma.done [#allocation3], 256
    $region37: #{tpu_custom_call.1} parent=1 // pred_fallthru
      _
    %177 = vsyncpa [#allocation3], 1

</llo_original>
